<compile_context>
chip_gen: v7x
topology: tpu7x:2x2x1
jax: 0.10.0
libtpu: 0.0.40
codegen_flags: <defaults>
</compile_context>

<pallas_src>
import numpy as np
import jax
import jax.numpy as jnp
from jax.experimental import pallas as pl
from jax.experimental.pallas import tpu as pltpu

INV_PI = 0.31830988618
PI_over_2 = 1.57079632679
PI_over_4 = 0.78539816339
TWO_PI = 2.0 * np.pi

N_MODES = 2   # forward() asserts n_modes == 2
DIM = 2       # 2-D samples

_LOG_GAUSS_C = float(-0.5 * DIM * np.log(2.0 * np.pi))
_LOG_INVPI_EPS = float(np.log(INV_PI + 1e-5))   # LambertianLobe.prob inside unit disk is constant
_LOG_EPS = float(np.log(1e-5))                  # ... and 0 outside -> log(0 + 1e-5)


def gmm_weighted_cond_kernel(cond_ref, rand_ref, w1_ref, b1_ref, w2_ref, b2_ref,
                             z_ref, logp_ref):
    x = cond_ref[...]                                                     # (C, TN)

    # --- MLP([cond_C, 32, 11]); batch stays on the lane axis ---
    # TODO(synk): exact mlp.MLP activation unknown; Linear -> ReLU -> Linear assumed.
    h = jnp.dot(w1_ref[...], x, preferred_element_type=jnp.float32) + b1_ref[...]    # (H, TN)
    h = jnp.maximum(h, 0.0)
    out = jnp.dot(w2_ref[...], h, preferred_element_type=jnp.float32) + b2_ref[...]  # (11, TN)

    # --- learn_prior: rows 0..3 loc (m0x,m0y,m1x,m1y), 4..7 log_scale, 8..10 raw weights ---
    loc = out[0:4, :]                                                     # (4, TN)
    ls = out[4:8, :]                                                      # (4, TN)
    w_raw = jnp.abs(out[8:11, :])                                         # (3, TN)
    inv_wsum = pl.reciprocal(jnp.sum(w_raw, axis=0, keepdims=True), approx=True)
    wn = w_raw * inv_wsum                                                 # (3, TN) normalized weights
    w0 = wn[0:1, :]
    w1 = wn[1:2, :]
    w2 = wn[2:3, :]

    r0 = rand_ref[0:1, :]
    r1 = rand_ref[1:2, :]

    # --- mode selection from cumulative weights ---
    wc0 = w0
    wc1 = w0 + w1
    gauss1 = r0 < wc0
    gauss2 = jnp.logical_and(jnp.logical_not(gauss1), r0 < wc1)
    gauss = jnp.logical_or(gauss1, gauss2)

    # in-place randseed re-normalization (inverse-CDF reuse of the uniform);
    # select the denominator first so only a single reciprocal is needed.
    numer = jnp.where(gauss1, r0, jnp.where(gauss2, r0 - wc0, r0 - wc1))
    denom = jnp.where(gauss1, wc0, jnp.where(gauss2, w1, w2))
    r0m = numer * pl.reciprocal(denom, approx=True)

    # exp(log_scale) and its reciprocal, grouped over all 4 scale rows (one EUP pass each)
    es = jnp.exp(ls)                                                      # (4, TN)
    inv_es = pl.reciprocal(es, approx=True)                               # (4, TN)

    # --- Gaussian branch: Box-Muller ---
    U1 = jnp.maximum(r0m, 1e-12)            # guard log(0) for selected gaussian lanes
    R = jnp.sqrt(-2.0 * jnp.log(U1))
    theta = TWO_PI * r1
    eps_x = R * jnp.cos(theta)
    eps_y = R * jnp.sin(theta)
    sel_locx = jnp.where(gauss1, loc[0:1, :], loc[2:3, :])
    sel_locy = jnp.where(gauss1, loc[1:2, :], loc[3:4, :])
    sel_sx = jnp.where(gauss1, es[0:1, :], es[2:3, :])
    sel_sy = jnp.where(gauss1, es[1:2, :], es[3:4, :])
    zg_x = eps_x * sel_sx + sel_locx
    zg_y = eps_y * sel_sy + sel_locy

    # --- Lambertian branch: concentric-disk mapping of (r0m, r1) ---
    wo0 = r0m * 2.0 - 1.0
    wo1 = r1 * 2.0 - 1.0
    zero_pos = jnp.logical_and(wo0 == 0.0, wo1 == 0.0)
    cond1 = jnp.logical_and(jnp.abs(wo0) > jnp.abs(wo1), jnp.logical_not(zero_pos))
    # single angle + single radius -> one cos and one sin instead of two each
    ang = jnp.where(cond1,
                    PI_over_4 * wo1 * pl.reciprocal(wo0, approx=True),
                    PI_over_2 - PI_over_4 * wo0 * pl.reciprocal(wo1, approx=True))
    r_l = jnp.where(cond1, wo0, wo1)
    zl_x = jnp.where(zero_pos, 0.0, r_l * jnp.cos(ang))
    zl_y = jnp.where(zero_pos, 0.0, r_l * jnp.sin(ang))

    # --- combine samples ---
    z_x = jnp.where(gauss, zg_x, zl_x)
    z_y = jnp.where(gauss, zg_y, zl_y)

    # --- mixture log-prob (eps math grouped across the 4 loc/scale rows) ---
    z2 = jnp.concatenate([z_x, z_y], axis=0)                              # (2, TN)
    z4 = jnp.concatenate([z2, z2], axis=0)                                # (4, TN)
    e = (z4 - loc) * inv_es                                               # (4, TN)
    sq = e * e
    sq0 = sq[0:1, :] + sq[1:2, :]
    sq1 = sq[2:3, :] + sq[3:4, :]
    ls_sum0 = ls[0:1, :] + ls[1:2, :]
    ls_sum1 = ls[2:3, :] + ls[3:4, :]
    logw = jnp.log(wn[0:2, :] + 1e-5)                                     # (2, TN) one grouped log
    lg0 = _LOG_GAUSS_C + logw[0:1, :] - 0.5 * sq0 - ls_sum0
    lg1 = _LOG_GAUSS_C + logw[1:2, :] - 0.5 * sq1 - ls_sum1
    invalid = (z_x * z_x + z_y * z_y) > 1.0
    # LambertianLobe.prob(z) is constant (1/pi inside unit disk, 0 outside) -> its log is a constant.
    # matches torch: no eps on log(weights[..., -1])
    llam = jnp.where(invalid, _LOG_EPS, _LOG_INVPI_EPS) + jnp.log(w2)

    # logsumexp over the 3 mixture components, grouped into one exp / log pass
    lstack = jnp.concatenate([lg0, lg1, llam], axis=0)                    # (3, TN)
    m = jnp.max(lstack, axis=0, keepdims=True)
    logp = m + jnp.log(jnp.sum(jnp.exp(lstack - m), axis=0, keepdims=True))

    # --- lane-dense stores ---
    z_ref[0:1, :] = z_x
    z_ref[1:2, :] = z_y
    logp_ref[...] = logp


def _pick_tile(N, requested):
    # Prefer the largest lane-dense tile that divides N (per-grid-step overhead ~0.35us dominates
    # this kernel at small tiles); never split just for the sake of more grid steps.
    t = min(requested, N)
    t = max(128, (t // 128) * 128)
    while N % t != 0:
        t -= 128
    return t


def gmm_weighted_cond_forward(cond_vec, randseed, params, *, tile_n=2048):
    """Pallas forward matching GMMWeightedCond.forward(cond_vec, N, randseed).

    cond_vec: (N, C) float32; randseed: (N, 2) uniform float32.
    params = (W1, b1, W2, b2) in torch Linear orientation: W1 (H, C), b1 (H,), W2 (F, H), b2 (F,).
    Returns (z (N,2), log_p (N,)).
    """
    w1, b1, w2, b2 = params
    N, C = cond_vec.shape
    H = w1.shape[0]
    F = w2.shape[0]
    assert N % 128 == 0, "batch must be a multiple of 128 (lane width)"
    tile_n = _pick_tile(N, tile_n)
    grid = (N // tile_n,)

    # layout plumbing: batch onto the lane axis
    cond_t = jnp.transpose(cond_vec)            # (C, N)
    rand_t = jnp.transpose(randseed)            # (2, N)
    b1c = b1.reshape(H, 1)
    b2c = b2.reshape(F, 1)

    cost = pl.CostEstimate(
        flops=2 * N * (C * H + H * F) + 64 * N,
        transcendentals=25 * N,
        bytes_accessed=4 * (N * (C + 2 + 2 + 1) + C * H + H + H * F + F),
    )

    z_t, logp = pl.pallas_call(
        gmm_weighted_cond_kernel,
        out_shape=(jax.ShapeDtypeStruct((2, N), jnp.float32),
                   jax.ShapeDtypeStruct((1, N), jnp.float32)),
        grid_spec=pltpu.PrefetchScalarGridSpec(
            num_scalar_prefetch=0,
            grid=grid,
            in_specs=[
                pl.BlockSpec((C, tile_n), lambda i: (0, i)),   # cond (C, N) tile
                pl.BlockSpec((2, tile_n), lambda i: (0, i)),   # randseed (2, N) tile
                pl.BlockSpec((H, C), lambda i: (0, 0)),        # W1 (broadcast across grid)
                pl.BlockSpec((H, 1), lambda i: (0, 0)),        # b1
                pl.BlockSpec((F, H), lambda i: (0, 0)),        # W2
                pl.BlockSpec((F, 1), lambda i: (0, 0)),        # b2
            ],
            out_specs=[
                pl.BlockSpec((2, tile_n), lambda i: (0, i)),   # z (lane-dense)
                pl.BlockSpec((1, tile_n), lambda i: (0, i)),   # log_p (lane-dense)
            ],
        ),
        compiler_params=pltpu.CompilerParams(dimension_semantics=("parallel",)),
        cost_estimate=cost,
    )(cond_t, rand_t, w1, b1c, w2, b2c)

    return jnp.transpose(z_t), logp[0]


if __name__ == "__main__":
    key = jax.random.PRNGKey(0)
    N, C, H = 256, 8, 32                         # num_samples == batch of cond_vec
    F = N_MODES * DIM * 2 + N_MODES + 1          # = 11 output features of the MLP

    k_cond, k_rand, k_w1, k_w2 = jax.random.split(key, 4)
    cond_vec = jax.random.normal(k_cond, (N, C), dtype=jnp.float32)
    # randseed (num_samples, 2) uniform, as the torch randseed path expects
    randseed = jax.random.uniform(k_rand, (N, 2), dtype=jnp.float32,
                                  minval=1e-6, maxval=1.0)

    # _initialize_weights: normal(std=0.01) weights, zero biases (torch Linear (out, in) orientation)
    w1 = 0.01 * jax.random.normal(k_w1, (H, C), dtype=jnp.float32)
    b1 = jnp.zeros((H,), dtype=jnp.float32)
    w2 = 0.01 * jax.random.normal(k_w2, (F, H), dtype=jnp.float32)
    b2 = jnp.zeros((F,), dtype=jnp.float32)

    z, logp = gmm_weighted_cond_forward(cond_vec, randseed, (w1, b1, w2, b2))
    jax.block_until_ready((z, logp))

    assert z.shape == (N, 2) and z.dtype == jnp.float32
    assert logp.shape == (N,) and logp.dtype == jnp.float32
    assert bool(jnp.all(jnp.isfinite(z))) and bool(jnp.all(jnp.isfinite(logp)))
    print("KERNEL_OK")
</pallas_src>

<mosaic_0001>
module attributes {stable_mosaic.version = 11 : i64} {
  func.func @gmm_weighted_cond_kernel(%arg0: i32, %arg1: memref<8x256xf32, #tpu.memory_space<vmem>>, %arg2: memref<2x256xf32, #tpu.memory_space<vmem>>, %arg3: memref<32x8xf32, #tpu.memory_space<vmem>>, %arg4: memref<32x1xf32, #tpu.memory_space<vmem>>, %arg5: memref<11x32xf32, #tpu.memory_space<vmem>>, %arg6: memref<11x1xf32, #tpu.memory_space<vmem>>, %arg7: memref<2x256xf32, #tpu.memory_space<vmem>>, %arg8: memref<1x256xf32, #tpu.memory_space<vmem>>) attributes {dimension_semantics = [#tpu.dimension_semantics<parallel>], iteration_bounds = array<i64: 1>, scalar_prefetch = 0 : i64, scratch_operands = 0 : i64, tpu.core_type = #tpu.core_type<tc>, window_params = [{transform_indices = @transform_0, window_bounds = array<i64: 8, 256>}, {transform_indices = @transform_1, window_bounds = array<i64: 2, 256>}, {pipeline_mode = #tpu.pipeline_mode<synchronous>, transform_indices = @transform_2, window_bounds = array<i64: 32, 8>}, {pipeline_mode = #tpu.pipeline_mode<synchronous>, transform_indices = @transform_3, window_bounds = array<i64: 32, 1>}, {pipeline_mode = #tpu.pipeline_mode<synchronous>, transform_indices = @transform_4, window_bounds = array<i64: 11, 32>}, {pipeline_mode = #tpu.pipeline_mode<synchronous>, transform_indices = @transform_5, window_bounds = array<i64: 11, 1>}, {transform_indices = @transform_6, window_bounds = array<i64: 2, 256>}, {transform_indices = @transform_7, window_bounds = array<i64: 1, 256>}]} {
    %c0 = arith.constant 0 : index
    %c0_0 = arith.constant 0 : index
    %0 = vector.load %arg1[%c0, %c0_0] : memref<8x256xf32, #tpu.memory_space<vmem>>, vector<8x256xf32>
    %c0_1 = arith.constant 0 : index
    %c0_2 = arith.constant 0 : index
    %1 = vector.load %arg3[%c0_1, %c0_2] : memref<32x8xf32, #tpu.memory_space<vmem>>, vector<32x8xf32>
    %cst = arith.constant dense<0.000000e+00> : vector<32x256xf32>
    %2 = tpu.matmul %1, %0, %cst {dimension_numbers = #tpu.dot_dimension_numbers<[1], [0], [0], [1], [0, 0, 1, 1], [], []>} : vector<32x8xf32>, vector<8x256xf32>, vector<32x256xf32> -> vector<32x256xf32>
    %c0_3 = arith.constant 0 : index
    %c0_4 = arith.constant 0 : index
    %3 = vector.load %arg4[%c0_3, %c0_4] : memref<32x1xf32, #tpu.memory_space<vmem>>, vector<32x1xf32>
    %4 = vector.broadcast %3 : vector<32x1xf32> to vector<32x256xf32>
    %5 = arith.addf %2, %4 : vector<32x256xf32>
    %cst_5 = arith.constant 0.000000e+00 : f32
    %6 = vector.broadcast %cst_5 : f32 to vector<32x256xf32>
    %7 = arith.maximumf %5, %6 : vector<32x256xf32>
    %c0_6 = arith.constant 0 : index
    %c0_7 = arith.constant 0 : index
    %8 = vector.load %arg5[%c0_6, %c0_7] : memref<11x32xf32, #tpu.memory_space<vmem>>, vector<11x32xf32>
    %cst_8 = arith.constant dense<0.000000e+00> : vector<11x256xf32>
    %9 = tpu.matmul %8, %7, %cst_8 {dimension_numbers = #tpu.dot_dimension_numbers<[1], [0], [0], [1], [0, 0, 1, 1], [], []>} : vector<11x32xf32>, vector<32x256xf32>, vector<11x256xf32> -> vector<11x256xf32>
    %c0_9 = arith.constant 0 : index
    %c0_10 = arith.constant 0 : index
    %10 = vector.load %arg6[%c0_9, %c0_10] : memref<11x1xf32, #tpu.memory_space<vmem>>, vector<11x1xf32>
    %11 = vector.broadcast %10 : vector<11x1xf32> to vector<11x256xf32>
    %12 = arith.addf %9, %11 : vector<11x256xf32>
    %13 = vector.extract_strided_slice %12 {offsets = [0, 0], sizes = [4, 256], strides = [1, 1]} : vector<11x256xf32> to vector<4x256xf32>
    %14 = vector.extract_strided_slice %12 {offsets = [4, 0], sizes = [4, 256], strides = [1, 1]} : vector<11x256xf32> to vector<4x256xf32>
    %15 = vector.extract_strided_slice %12 {offsets = [8, 0], sizes = [3, 256], strides = [1, 1]} : vector<11x256xf32> to vector<3x256xf32>
    %16 = math.absf %15 : vector<3x256xf32>
    %cst_11 = arith.constant dense<0.000000e+00> : vector<256xf32>
    %17 = vector.multi_reduction <add>, %16, %cst_11 [0] : vector<3x256xf32> to vector<256xf32>
    %18 = vector.shape_cast %17 : vector<256xf32> to vector<1x256xf32>
    %19 = tpu.reciprocal %18 {approx = true} : vector<1x256xf32> -> vector<1x256xf32>
    %20 = vector.broadcast %19 : vector<1x256xf32> to vector<3x256xf32>
    %21 = arith.mulf %16, %20 : vector<3x256xf32>
    %22 = vector.extract_strided_slice %21 {offsets = [0, 0], sizes = [1, 256], strides = [1, 1]} : vector<3x256xf32> to vector<1x256xf32>
    %23 = vector.extract_strided_slice %21 {offsets = [1, 0], sizes = [1, 256], strides = [1, 1]} : vector<3x256xf32> to vector<1x256xf32>
    %24 = vector.extract_strided_slice %21 {offsets = [2, 0], sizes = [1, 256], strides = [1, 1]} : vector<3x256xf32> to vector<1x256xf32>
    %c0_12 = arith.constant 0 : index
    %c0_13 = arith.constant 0 : index
    %25 = vector.load %arg2[%c0_12, %c0_13] : memref<2x256xf32, #tpu.memory_space<vmem>>, vector<1x256xf32>
    %c1 = arith.constant 1 : index
    %c0_14 = arith.constant 0 : index
    %26 = vector.load %arg2[%c1, %c0_14] : memref<2x256xf32, #tpu.memory_space<vmem>>, vector<1x256xf32>
    %27 = arith.addf %22, %23 : vector<1x256xf32>
    %28 = arith.cmpf olt, %25, %22 : vector<1x256xf32>
    %cst_15 = arith.constant dense<true> : vector<1x256xi1>
    %29 = arith.xori %28, %cst_15 : vector<1x256xi1>
    %30 = arith.cmpf olt, %25, %27 : vector<1x256xf32>
    %31 = arith.andi %29, %30 : vector<1x256xi1>
    %32 = arith.ori %28, %31 : vector<1x256xi1>
    %33 = arith.subf %25, %22 : vector<1x256xf32>
    %34 = arith.subf %25, %27 : vector<1x256xf32>
    %35 = arith.select %31, %33, %34 : vector<1x256xi1>, vector<1x256xf32>
    %36 = arith.select %28, %25, %35 : vector<1x256xi1>, vector<1x256xf32>
    %37 = arith.select %31, %23, %24 : vector<1x256xi1>, vector<1x256xf32>
    %38 = arith.select %28, %22, %37 : vector<1x256xi1>, vector<1x256xf32>
    %39 = tpu.reciprocal %38 {approx = true} : vector<1x256xf32> -> vector<1x256xf32>
    %40 = arith.mulf %36, %39 : vector<1x256xf32>
    %41 = math.exp %14 : vector<4x256xf32>
    %42 = tpu.reciprocal %41 {approx = true} : vector<4x256xf32> -> vector<4x256xf32>
    %cst_16 = arith.constant 9.99999996E-13 : f32
    %43 = vector.broadcast %cst_16 : f32 to vector<1x256xf32>
    %44 = arith.maximumf %40, %43 : vector<1x256xf32>
    %45 = math.log %44 : vector<1x256xf32>
    %cst_17 = arith.constant -2.000000e+00 : f32
    %46 = vector.broadcast %cst_17 : f32 to vector<1x256xf32>
    %47 = arith.mulf %46, %45 : vector<1x256xf32>
    %48 = math.sqrt %47 : vector<1x256xf32>
    %cst_18 = arith.constant 6.28318548 : f32
    %49 = vector.broadcast %cst_18 : f32 to vector<1x256xf32>
    %50 = arith.mulf %49, %26 : vector<1x256xf32>
    %51 = math.cos %50 : vector<1x256xf32>
    %52 = arith.mulf %48, %51 : vector<1x256xf32>
    %53 = math.sin %50 : vector<1x256xf32>
    %54 = arith.mulf %48, %53 : vector<1x256xf32>
    %55 = vector.extract_strided_slice %13 {offsets = [0, 0], sizes = [1, 256], strides = [1, 1]} : vector<4x256xf32> to vector<1x256xf32>
    %56 = vector.extract_strided_slice %13 {offsets = [2, 0], sizes = [1, 256], strides = [1, 1]} : vector<4x256xf32> to vector<1x256xf32>
    %57 = arith.select %28, %55, %56 : vector<1x256xi1>, vector<1x256xf32>
    %58 = vector.extract_strided_slice %13 {offsets = [1, 0], sizes = [1, 256], strides = [1, 1]} : vector<4x256xf32> to vector<1x256xf32>
    %59 = vector.extract_strided_slice %13 {offsets = [3, 0], sizes = [1, 256], strides = [1, 1]} : vector<4x256xf32> to vector<1x256xf32>
    %60 = arith.select %28, %58, %59 : vector<1x256xi1>, vector<1x256xf32>
    %61 = vector.extract_strided_slice %41 {offsets = [0, 0], sizes = [1, 256], strides = [1, 1]} : vector<4x256xf32> to vector<1x256xf32>
    %62 = vector.extract_strided_slice %41 {offsets = [2, 0], sizes = [1, 256], strides = [1, 1]} : vector<4x256xf32> to vector<1x256xf32>
    %63 = arith.select %28, %61, %62 : vector<1x256xi1>, vector<1x256xf32>
    %64 = vector.extract_strided_slice %41 {offsets = [1, 0], sizes = [1, 256], strides = [1, 1]} : vector<4x256xf32> to vector<1x256xf32>
    %65 = vector.extract_strided_slice %41 {offsets = [3, 0], sizes = [1, 256], strides = [1, 1]} : vector<4x256xf32> to vector<1x256xf32>
    %66 = arith.select %28, %64, %65 : vector<1x256xi1>, vector<1x256xf32>
    %67 = arith.mulf %52, %63 : vector<1x256xf32>
    %68 = arith.addf %67, %57 : vector<1x256xf32>
    %69 = arith.mulf %54, %66 : vector<1x256xf32>
    %70 = arith.addf %69, %60 : vector<1x256xf32>
    %cst_19 = arith.constant 2.000000e+00 : f32
    %71 = vector.broadcast %cst_19 : f32 to vector<1x256xf32>
    %72 = arith.mulf %40, %71 : vector<1x256xf32>
    %cst_20 = arith.constant 1.000000e+00 : f32
    %73 = vector.broadcast %cst_20 : f32 to vector<1x256xf32>
    %74 = arith.subf %72, %73 : vector<1x256xf32>
    %cst_21 = arith.constant 2.000000e+00 : f32
    %75 = vector.broadcast %cst_21 : f32 to vector<1x256xf32>
    %76 = arith.mulf %26, %75 : vector<1x256xf32>
    %cst_22 = arith.constant 1.000000e+00 : f32
    %77 = vector.broadcast %cst_22 : f32 to vector<1x256xf32>
    %78 = arith.subf %76, %77 : vector<1x256xf32>
    %cst_23 = arith.constant 0.000000e+00 : f32
    %79 = vector.broadcast %cst_23 : f32 to vector<1x256xf32>
    %80 = arith.cmpf oeq, %74, %79 : vector<1x256xf32>
    %cst_24 = arith.constant 0.000000e+00 : f32
    %81 = vector.broadcast %cst_24 : f32 to vector<1x256xf32>
    %82 = arith.cmpf oeq, %78, %81 : vector<1x256xf32>
    %83 = arith.andi %80, %82 : vector<1x256xi1>
    %84 = math.absf %74 : vector<1x256xf32>
    %85 = math.absf %78 : vector<1x256xf32>
    %86 = arith.cmpf ogt, %84, %85 : vector<1x256xf32>
    %cst_25 = arith.constant dense<true> : vector<1x256xi1>
    %87 = arith.xori %83, %cst_25 : vector<1x256xi1>
    %88 = arith.andi %86, %87 : vector<1x256xi1>
    %cst_26 = arith.constant 0.785398185 : f32
    %89 = vector.broadcast %cst_26 : f32 to vector<1x256xf32>
    %90 = arith.mulf %89, %78 : vector<1x256xf32>
    %91 = tpu.reciprocal %74 {approx = true} : vector<1x256xf32> -> vector<1x256xf32>
    %92 = arith.mulf %90, %91 : vector<1x256xf32>
    %cst_27 = arith.constant 0.785398185 : f32
    %93 = vector.broadcast %cst_27 : f32 to vector<1x256xf32>
    %94 = arith.mulf %93, %74 : vector<1x256xf32>
    %95 = tpu.reciprocal %78 {approx = true} : vector<1x256xf32> -> vector<1x256xf32>
    %96 = arith.mulf %94, %95 : vector<1x256xf32>
    %cst_28 = arith.constant 1.57079637 : f32
    %97 = vector.broadcast %cst_28 : f32 to vector<1x256xf32>
    %98 = arith.subf %97, %96 : vector<1x256xf32>
    %99 = arith.select %88, %92, %98 : vector<1x256xi1>, vector<1x256xf32>
    %100 = arith.select %88, %74, %78 : vector<1x256xi1>, vector<1x256xf32>
    %101 = math.cos %99 : vector<1x256xf32>
    %102 = arith.mulf %100, %101 : vector<1x256xf32>
    %cst_29 = arith.constant 0.000000e+00 : f32
    %103 = vector.broadcast %cst_29 : f32 to vector<1x256xf32>
    %104 = arith.select %83, %103, %102 : vector<1x256xi1>, vector<1x256xf32>
    %105 = math.sin %99 : vector<1x256xf32>
    %106 = arith.mulf %100, %105 : vector<1x256xf32>
    %cst_30 = arith.constant 0.000000e+00 : f32
    %107 = vector.broadcast %cst_30 : f32 to vector<1x256xf32>
    %108 = arith.select %83, %107, %106 : vector<1x256xi1>, vector<1x256xf32>
    %109 = arith.select %32, %68, %104 : vector<1x256xi1>, vector<1x256xf32>
    %110 = arith.select %32, %70, %108 : vector<1x256xi1>, vector<1x256xf32>
    %111 = tpu.concatenate %109, %110 in 0 : vector<1x256xf32>, vector<1x256xf32> -> vector<2x256xf32>
    %112 = tpu.concatenate %111, %111 in 0 : vector<2x256xf32>, vector<2x256xf32> -> vector<4x256xf32>
    %113 = arith.subf %112, %13 : vector<4x256xf32>
    %114 = arith.mulf %113, %42 : vector<4x256xf32>
    %115 = arith.mulf %114, %114 : vector<4x256xf32>
    %116 = vector.extract_strided_slice %115 {offsets = [0, 0], sizes = [1, 256], strides = [1, 1]} : vector<4x256xf32> to vector<1x256xf32>
    %117 = vector.extract_strided_slice %115 {offsets = [1, 0], sizes = [1, 256], strides = [1, 1]} : vector<4x256xf32> to vector<1x256xf32>
    %118 = arith.addf %116, %117 : vector<1x256xf32>
    %119 = vector.extract_strided_slice %115 {offsets = [2, 0], sizes = [1, 256], strides = [1, 1]} : vector<4x256xf32> to vector<1x256xf32>
    %120 = vector.extract_strided_slice %115 {offsets = [3, 0], sizes = [1, 256], strides = [1, 1]} : vector<4x256xf32> to vector<1x256xf32>
    %121 = arith.addf %119, %120 : vector<1x256xf32>
    %122 = vector.extract_strided_slice %14 {offsets = [0, 0], sizes = [1, 256], strides = [1, 1]} : vector<4x256xf32> to vector<1x256xf32>
    %123 = vector.extract_strided_slice %14 {offsets = [1, 0], sizes = [1, 256], strides = [1, 1]} : vector<4x256xf32> to vector<1x256xf32>
    %124 = arith.addf %122, %123 : vector<1x256xf32>
    %125 = vector.extract_strided_slice %14 {offsets = [2, 0], sizes = [1, 256], strides = [1, 1]} : vector<4x256xf32> to vector<1x256xf32>
    %126 = vector.extract_strided_slice %14 {offsets = [3, 0], sizes = [1, 256], strides = [1, 1]} : vector<4x256xf32> to vector<1x256xf32>
    %127 = arith.addf %125, %126 : vector<1x256xf32>
    %128 = vector.extract_strided_slice %21 {offsets = [0, 0], sizes = [2, 256], strides = [1, 1]} : vector<3x256xf32> to vector<2x256xf32>
    %cst_31 = arith.constant 9.99999974E-6 : f32
    %129 = vector.broadcast %cst_31 : f32 to vector<2x256xf32>
    %130 = arith.addf %128, %129 : vector<2x256xf32>
    %131 = math.log %130 : vector<2x256xf32>
    %132 = vector.extract_strided_slice %131 {offsets = [0, 0], sizes = [1, 256], strides = [1, 1]} : vector<2x256xf32> to vector<1x256xf32>
    %cst_32 = arith.constant -1.83787704 : f32
    %133 = vector.broadcast %cst_32 : f32 to vector<1x256xf32>
    %134 = arith.addf %133, %132 : vector<1x256xf32>
    %cst_33 = arith.constant 5.000000e-01 : f32
    %135 = vector.broadcast %cst_33 : f32 to vector<1x256xf32>
    %136 = arith.mulf %135, %118 : vector<1x256xf32>
    %137 = arith.subf %134, %136 : vector<1x256xf32>
    %138 = arith.subf %137, %124 : vector<1x256xf32>
    %139 = vector.extract_strided_slice %131 {offsets = [1, 0], sizes = [1, 256], strides = [1, 1]} : vector<2x256xf32> to vector<1x256xf32>
    %cst_34 = arith.constant -1.83787704 : f32
    %140 = vector.broadcast %cst_34 : f32 to vector<1x256xf32>
    %141 = arith.addf %140, %139 : vector<1x256xf32>
    %cst_35 = arith.constant 5.000000e-01 : f32
    %142 = vector.broadcast %cst_35 : f32 to vector<1x256xf32>
    %143 = arith.mulf %142, %121 : vector<1x256xf32>
    %144 = arith.subf %141, %143 : vector<1x256xf32>
    %145 = arith.subf %144, %127 : vector<1x256xf32>
    %146 = arith.mulf %109, %109 : vector<1x256xf32>
    %147 = arith.mulf %110, %110 : vector<1x256xf32>
    %148 = arith.addf %146, %147 : vector<1x256xf32>
    %cst_36 = arith.constant 1.000000e+00 : f32
    %149 = vector.broadcast %cst_36 : f32 to vector<1x256xf32>
    %150 = arith.cmpf ogt, %148, %149 : vector<1x256xf32>
    %cst_37 = arith.constant -11.5129251 : f32
    %cst_38 = arith.constant -1.1446985 : f32
    %151 = vector.broadcast %cst_37 : f32 to vector<1x256xf32>
    %152 = vector.broadcast %cst_38 : f32 to vector<1x256xf32>
    %153 = arith.select %150, %151, %152 : vector<1x256xi1>, vector<1x256xf32>
    %154 = math.log %24 : vector<1x256xf32>
    %155 = arith.addf %153, %154 : vector<1x256xf32>
    %156 = tpu.concatenate %138, %145, %155 in 0 : vector<1x256xf32>, vector<1x256xf32>, vector<1x256xf32> -> vector<3x256xf32>
    %cst_39 = arith.constant dense<0xFF800000> : vector<256xf32>
    %157 = vector.multi_reduction <maximumf>, %156, %cst_39 [0] : vector<3x256xf32> to vector<256xf32>
    %158 = vector.shape_cast %157 : vector<256xf32> to vector<1x256xf32>
    %159 = vector.broadcast %158 : vector<1x256xf32> to vector<3x256xf32>
    %160 = arith.subf %156, %159 : vector<3x256xf32>
    %161 = math.exp %160 : vector<3x256xf32>
    %cst_40 = arith.constant dense<0.000000e+00> : vector<256xf32>
    %162 = vector.multi_reduction <add>, %161, %cst_40 [0] : vector<3x256xf32> to vector<256xf32>
    %163 = vector.shape_cast %162 : vector<256xf32> to vector<1x256xf32>
    %164 = math.log %163 : vector<1x256xf32>
    %165 = arith.addf %158, %164 : vector<1x256xf32>
    %c0_41 = arith.constant 0 : index
    %c0_42 = arith.constant 0 : index
    %166 = vector.load %arg7[%c0_41, %c0_42] : memref<2x256xf32, #tpu.memory_space<vmem>>, vector<1x256xf32>
    tpu.vector_store %arg7[%c0_41, %c0_42], %109 {strides = array<i32>} : memref<2x256xf32, #tpu.memory_space<vmem>>, vector<1x256xf32>,
    %c1_43 = arith.constant 1 : index
    %c0_44 = arith.constant 0 : index
    %167 = vector.load %arg7[%c1_43, %c0_44] : memref<2x256xf32, #tpu.memory_space<vmem>>, vector<1x256xf32>
    tpu.vector_store %arg7[%c1_43, %c0_44], %110 {strides = array<i32>} : memref<2x256xf32, #tpu.memory_space<vmem>>, vector<1x256xf32>,
    %c0_45 = arith.constant 0 : index
    %c0_46 = arith.constant 0 : index
    %168 = vector.load %arg8[%c0_45, %c0_46] : memref<1x256xf32, #tpu.memory_space<vmem>>, vector<1x256xf32>
    tpu.vector_store %arg8[%c0_45, %c0_46], %165 {strides = array<i32>} : memref<1x256xf32, #tpu.memory_space<vmem>>, vector<1x256xf32>,
    return
  }
  func.func @transform_0(%arg0: i32) -> (i32, i32) {
    %c0_i32 = arith.constant 0 : i32
    %c0_i32_0 = arith.constant 0 : i32
    return %c0_i32, %arg0 : i32, i32
  }
  func.func @transform_1(%arg0: i32) -> (i32, i32) {
    %c0_i32 = arith.constant 0 : i32
    %c0_i32_0 = arith.constant 0 : i32
    return %c0_i32, %arg0 : i32, i32
  }
  func.func @transform_2(%arg0: i32) -> (i32, i32) {
    %c0_i32 = arith.constant 0 : i32
    %c0_i32_0 = arith.constant 0 : i32
    %c0_i32_1 = arith.constant 0 : i32
    return %c0_i32, %c0_i32_0 : i32, i32
  }
  func.func @transform_3(%arg0: i32) -> (i32, i32) {
    %c0_i32 = arith.constant 0 : i32
    %c0_i32_0 = arith.constant 0 : i32
    %c0_i32_1 = arith.constant 0 : i32
    return %c0_i32, %c0_i32_0 : i32, i32
  }
  func.func @transform_4(%arg0: i32) -> (i32, i32) {
    %c0_i32 = arith.constant 0 : i32
    %c0_i32_0 = arith.constant 0 : i32
    %c0_i32_1 = arith.constant 0 : i32
    return %c0_i32, %c0_i32_0 : i32, i32
  }
  func.func @transform_5(%arg0: i32) -> (i32, i32) {
    %c0_i32 = arith.constant 0 : i32
    %c0_i32_0 = arith.constant 0 : i32
    %c0_i32_1 = arith.constant 0 : i32
    return %c0_i32, %c0_i32_0 : i32, i32
  }
  func.func @transform_6(%arg0: i32) -> (i32, i32) {
    %c0_i32 = arith.constant 0 : i32
    %c0_i32_0 = arith.constant 0 : i32
    return %c0_i32, %arg0 : i32, i32
  }
  func.func @transform_7(%arg0: i32) -> (i32, i32) {
    %c0_i32 = arith.constant 0 : i32
    %c0_i32_0 = arith.constant 0 : i32
    return %c0_i32, %arg0 : i32, i32
  }
}

</mosaic_0001>

<llo_original>
// kernel: tpu_custom_call.1
$region0: #{tpu_custom_call.1}
  #allocation0 [shape = 'u32[]', space=smem, size = 0x4, offset = 0x4, fixed_abs, tag = 'smem constant byte address 0x4 - core index']
  #allocation1 [shape = 'u32[144,128]{1,0:T(1,128)}', space=vmem, size = 0x12000, scoped, tag = 'internal scratch']
  %s0 = inlined_call_operand.vmem [shape: f32[8,256], index: 0, kind: input, shape index: {}]
  %s1 = inlined_call_operand.vmem [shape: f32[2,256], index: 1, kind: input, shape index: {}]
  %s2 = inlined_call_operand.vmem [shape: f32[32,8], index: 2, kind: input, shape index: {}]
  %s3 = inlined_call_operand.vmem [shape: f32[32,1], index: 3, kind: input, shape index: {}]
  %s4 = inlined_call_operand.vmem [shape: f32[11,32], index: 4, kind: input, shape index: {}]
  %s5 = inlined_call_operand.vmem [shape: f32[11,1], index: 5, kind: input, shape index: {}]
  %s6 = inlined_call_operand.hbm [shape: f32[2,256], index: 6, kind: output, shape index: {0}]
  %s7 = inlined_call_operand.hbm [shape: f32[1,256], index: 7, kind: output, shape index: {1}]
  %8 = xla_tuple %s6, %s7
  %s9 = sld [smem:[#allocation0]]
  $region42: #{tpu_custom_call.1} parent=0
    _
  %s11 = ssub.s32 1, %s9
  %s12 = scalar_select 0, %s11, %s9
  $region1: #{tpu_custom_call.1} parent=0
    #allocation2 [shape = 'u8[2048]{0}', space=vmem, size = 0x800, scoped, tag = 'output window, operand 0, single buffered']
    #allocation3 [shape = 's32[1]{0}', space=sflag, size = 0x4, scoped, tag = 'scoped memory for tpu_custom_call.1']
    #allocation4 [shape = 'u8[1024]{0}', space=vmem, size = 0x400, scoped, tag = 'output window, operand 1, single buffered']
    #allocation5 [shape = 's32[1]{0}', space=sflag, size = 0x4, scoped, tag = 'scoped memory for tpu_custom_call.1']
    %13 = vsyncpa [#allocation3], 0
    %14 = vsyncpa [#allocation5], 0
    // Predicated region
    $region2: #{tpu_custom_call.1} parent=1 // pred_check
      _
    $region3: #{tpu_custom_call.1} parent=1 // pred_check_branch
      %16 = sbr.rel (0) target = $region5
    $region4: #{tpu_custom_call.1} parent=1 // pred_region
      _
    $region5: #{tpu_custom_call.1} parent=1 // pred_fallthru
      _
    // Predicated region
    $region6: #{tpu_custom_call.1} parent=1 // pred_check
      _
    $region7: #{tpu_custom_call.1} parent=1 // pred_check_branch
      %18 = sbr.rel (0) target = $region9
    $region8: #{tpu_custom_call.1} parent=1 // pred_region
      _
    $region9: #{tpu_custom_call.1} parent=1 // pred_fallthru
      _
    // Predicated region
    $region10: #{tpu_custom_call.1} parent=1 // pred_check
      _
    $region11: #{tpu_custom_call.1} parent=1 // pred_check_branch
      %20 = sbr.rel (0) target = $region13
    $region12: #{tpu_custom_call.1} parent=1 // pred_region
      _
    $region13: #{tpu_custom_call.1} parent=1 // pred_fallthru
      _
    // Predicated region
    $region14: #{tpu_custom_call.1} parent=1 // pred_check
      _
    $region15: #{tpu_custom_call.1} parent=1 // pred_check_branch
      %22 = sbr.rel (0) target = $region17
    $region16: #{tpu_custom_call.1} parent=1 // pred_region
      _
    $region17: #{tpu_custom_call.1} parent=1 // pred_fallthru
      _
    // Predicated region
    $region18: #{tpu_custom_call.1} parent=1 // pred_check
      _
    $region19: #{tpu_custom_call.1} parent=1 // pred_check_branch
      %24 = sbr.rel (0) target = $region21
    $region20: #{tpu_custom_call.1} parent=1 // pred_region
      _
    $region21: #{tpu_custom_call.1} parent=1 // pred_fallthru
      _
    // Predicated region
    $region22: #{tpu_custom_call.1} parent=1 // pred_check
      _
    $region23: #{tpu_custom_call.1} parent=1 // pred_check_branch
      %26 = sbr.rel (0) target = $region25
    $region24: #{tpu_custom_call.1} parent=1 // pred_region
      _
    $region25: #{tpu_custom_call.1} parent=1 // pred_fallthru
      _
    %v27 = vld [vmem:[%s0] sm:$0xff]
    %v28 = vld [vmem:[%s0 + $0x8] sm:$0xff]
    %v29 = vld [vmem:[%s2] sm:$0xff]
    %v30 = vld [vmem:[%s2 + $0x8] sm:$0xff]
    %v31 = vld [vmem:[%s2 + $0x10] sm:$0xff]
    %v32 = vld [vmem:[%s2 + $0x18] sm:$0xff]
    %v33 = vld [vmem:[%s3] sm:$0xff]
    %v34 = vld [vmem:[%s3 + $0x8] sm:$0xff]
    %v35 = vld [vmem:[%s3 + $0x10] sm:$0xff]
    %v36 = vld [vmem:[%s3 + $0x18] sm:$0xff]
    %38 = vset.pattern.permute.xlu0 0
    %39 = vperm.xlu0 %38, %v33
    %v40 = vpop.permute.xlu0 %39
    %43 = vset.pattern.permute.xlu0 0
    %44 = vperm.xlu0 %43, %v34
    %v45 = vpop.permute.xlu0 %44
    %48 = vset.pattern.permute.xlu0 0
    %49 = vperm.xlu0 %48, %v35
    %v50 = vpop.permute.xlu0 %49
    %53 = vset.pattern.permute.xlu0 0
    %54 = vperm.xlu0 %53, %v36
    %v55 = vpop.permute.xlu0 %54
    %vm57 = vcmask 64512
    %v59 = vsel %vm57, %v29, 0
    %v62 = vsel %vm57, %v30, 0
    %v65 = vsel %vm57, %v31, 0
    %v68 = vsel %vm57, %v32, 0
    %70 = vmatprep.subr.mxu0 %v28
    %71 = vmatpush1.msra.mxu0 %v27
    %72 = vmatprep.subr.mxu0 0.0
    %73 = vmatpush1.msra.mxu0 0.0
    %74 = vmatprep.subr.mxu0 0.0
    %75 = vmatpush1.msra.mxu0 0.0
    %76 = vmatprep.subr.mxu0 0.0
    %77 = vmatpush1.msra.mxu0 0.0
    %78 = vmatprep.subr.mxu0 0.0
    %79 = vmatpush1.msra.mxu0 0.0
    %80 = vmatprep.subr.mxu0 0.0
    %81 = vmatpush1.msra.mxu0 0.0
    %82 = vmatprep.subr.mxu0 0.0
    %83 = vmatpush1.msra.mxu0 0.0
    %84 = vmatprep.subr.mxu0 0.0
    %85 = vmatpush1.msra.mxu0 0.0
    %86 = vmatprep.subr.mxu0 0.0
    %87 = vmatpush1.msra.mxu0 0.0
    %88 = vmatprep.subr.mxu0 0.0
    %89 = vmatpush1.msra.mxu0 0.0
    %90 = vmatprep.subr.mxu0 0.0
    %91 = vmatpush1.msra.mxu0 0.0
    %92 = vmatprep.subr.mxu0 0.0
    %93 = vmatpush1.msra.mxu0 0.0
    %94 = vmatprep.subr.mxu0 0.0
    %95 = vmatpush1.msra.mxu0 0.0
    %96 = vmatprep.subr.mxu0 0.0
    %97 = vmatpush1.msra.mxu0 0.0
    %98 = vmatprep.subr.mxu0 0.0
    %99 = vmatpush1.msra.mxu0 0.0
    %100 = vmatprep.subr.mxu0 0.0
    %101 = vmatpush1.msra.mxu0 0.0
    %102 = vmatprep.subr.mxu0 0.0
    %103 = vmatpush1.msra.mxu0 0.0
    %104 = vmatprep.subr.mxu0 0.0
    %105 = vmatpush1.msra.mxu0 0.0
    %106 = vmatprep.subr.mxu0 0.0
    %107 = vmatpush1.msra.mxu0 0.0
    %108 = vmatprep.subr.mxu0 0.0
    %109 = vmatpush1.msra.mxu0 0.0
    %110 = vmatprep.subr.mxu0 0.0
    %111 = vmatpush1.msra.mxu0 0.0
    %112 = vmatprep.subr.mxu0 0.0
    %113 = vmatpush1.msra.mxu0 0.0
    %114 = vmatprep.subr.mxu0 0.0
    %115 = vmatpush1.msra.mxu0 0.0
    %116 = vmatprep.subr.mxu0 0.0
    %117 = vmatpush1.msra.mxu0 0.0
    %118 = vmatprep.subr.mxu0 0.0
    %119 = vmatpush1.msra.mxu0 0.0
    %120 = vmatprep.subr.mxu0 0.0
    %121 = vmatpush1.msra.mxu0 0.0
    %122 = vmatprep.subr.mxu0 0.0
    %123 = vmatpush1.msra.mxu0 0.0
    %124 = vmatprep.subr.mxu0 0.0
    %125 = vmatpush1.msra.mxu0 0.0
    %126 = vmatprep.subr.mxu0 0.0
    %127 = vmatpush1.msra.mxu0 0.0
    %128 = vmatprep.subr.mxu0 0.0
    %129 = vmatpush1.msra.mxu0 0.0
    %130 = vmatprep.subr.mxu0 0.0
    %131 = vmatpush1.msra.mxu0 0.0
    %132 = vmatprep.subr.mxu0 0.0
    %133 = vmatpush1.msra.mxu0 0.0
    %134 = vmatprep.mubr.f32.mxu0 0.0
    %135 = vmatmul.mubr.f32.gmra.mrb[0].mxu0 %v59
    %v136 = vpop.f32.mrb[0].mxu0
    %v137 = vadd.f32 %v40, %v136
    %v138 = vpop.f32.mrb[0].mxu0
    %v139 = vadd.f32 %v40, %v138
    %140 = vmatprep.mubr.f32.mxu0 0.0
    %141 = vmatmul.mubr.f32.gmra.mrb[0].mxu0 %v62
    %v142 = vpop.f32.mrb[0].mxu0
    %v143 = vadd.f32 %v45, %v142
    %v144 = vpop.f32.mrb[0].mxu0
    %v145 = vadd.f32 %v45, %v144
    %146 = vmatprep.mubr.f32.mxu0 0.0
    %147 = vmatmul.mubr.f32.gmra.mrb[0].mxu0 %v65
    %v148 = vpop.f32.mrb[0].mxu0
    %v149 = vadd.f32 %v50, %v148
    %v150 = vpop.f32.mrb[0].mxu0
    %v151 = vadd.f32 %v50, %v150
    %152 = vmatprep.mubr.f32.mxu0 0.0
    %153 = vmatmul.mubr.f32.gmra.mrb[0].mxu0 %v68
    %v154 = vpop.f32.mrb[0].mxu0
    %v155 = vadd.f32 %v55, %v154
    %v156 = vpop.f32.mrb[0].mxu0
    %v157 = vadd.f32 %v55, %v156
    %158 = vdwg.mxu0
    %v159 = vmax.f32 %v137, 0.0
    %v160 = vmax.f32 %v139, 0.0
    %v161 = vmax.f32 %v143, 0.0
    %v162 = vmax.f32 %v145, 0.0
    %v163 = vmax.f32 %v149, 0.0
    %v164 = vmax.f32 %v151, 0.0
    %v165 = vmax.f32 %v155, 0.0
    %v166 = vmax.f32 %v157, 0.0
    %v167 = vld [vmem:[%s4] sm:$0xff]
    %v168 = vld [vmem:[%s4 + $0x8] sm:$0x7]
    %v169 = vld [vmem:[%s5] sm:$0xff]
    %v170 = vld [vmem:[%s5 + $0x8] sm:$0x7]
    %172 = vset.pattern.permute.xlu0 0
    %173 = vperm.xlu0 %172, %v169
    %v174 = vpop.permute.xlu0 %173
    %177 = vset.pattern.permute.xlu0 0
    %178 = vperm.xlu0 %177, %v170
    %v179 = vpop.permute.xlu0 %178
    %vm181 = vcmask 261120
    %v183 = vsel %vm181, %v167, 0
    %v186 = vsel %vm181, %v168, 0
    %188 = vmatprep.subr.mxu0 %v160
    %189 = vmatpush1.msra.mxu0 %v159
    %190 = vmatprep.subr.mxu0 %v162
    %191 = vmatpush1.msra.mxu0 %v161
    %192 = vmatprep.subr.mxu0 %v164
    %193 = vmatpush1.msra.mxu0 %v163
    %194 = vmatprep.subr.mxu0 %v166
    %195 = vmatpush1.msra.mxu0 %v165
    %196 = vmatprep.subr.mxu0 0.0
    %197 = vmatpush1.msra.mxu0 0.0
    %198 = vmatprep.subr.mxu0 0.0
    %199 = vmatpush1.msra.mxu0 0.0
    %200 = vmatprep.subr.mxu0 0.0
    %201 = vmatpush1.msra.mxu0 0.0
    %202 = vmatprep.subr.mxu0 0.0
    %203 = vmatpush1.msra.mxu0 0.0
    %204 = vmatprep.subr.mxu0 0.0
    %205 = vmatpush1.msra.mxu0 0.0
    %206 = vmatprep.subr.mxu0 0.0
    %207 = vmatpush1.msra.mxu0 0.0
    %208 = vmatprep.subr.mxu0 0.0
    %209 = vmatpush1.msra.mxu0 0.0
    %210 = vmatprep.subr.mxu0 0.0
    %211 = vmatpush1.msra.mxu0 0.0
    %212 = vmatprep.subr.mxu0 0.0
    %213 = vmatpush1.msra.mxu0 0.0
    %214 = vmatprep.subr.mxu0 0.0
    %215 = vmatpush1.msra.mxu0 0.0
    %216 = vmatprep.subr.mxu0 0.0
    %217 = vmatpush1.msra.mxu0 0.0
    %218 = vmatprep.subr.mxu0 0.0
    %219 = vmatpush1.msra.mxu0 0.0
    %220 = vmatprep.subr.mxu0 0.0
    %221 = vmatpush1.msra.mxu0 0.0
    %222 = vmatprep.subr.mxu0 0.0
    %223 = vmatpush1.msra.mxu0 0.0
    %224 = vmatprep.subr.mxu0 0.0
    %225 = vmatpush1.msra.mxu0 0.0
    %226 = vmatprep.subr.mxu0 0.0
    %227 = vmatpush1.msra.mxu0 0.0
    %228 = vmatprep.subr.mxu0 0.0
    %229 = vmatpush1.msra.mxu0 0.0
    %230 = vmatprep.subr.mxu0 0.0
    %231 = vmatpush1.msra.mxu0 0.0
    %232 = vmatprep.subr.mxu0 0.0
    %233 = vmatpush1.msra.mxu0 0.0
    %234 = vmatprep.subr.mxu0 0.0
    %235 = vmatpush1.msra.mxu0 0.0
    %236 = vmatprep.subr.mxu0 0.0
    %237 = vmatpush1.msra.mxu0 0.0
    %238 = vmatprep.subr.mxu0 0.0
    %239 = vmatpush1.msra.mxu0 0.0
    %240 = vmatprep.subr.mxu0 0.0
    %241 = vmatpush1.msra.mxu0 0.0
    %242 = vmatprep.subr.mxu0 0.0
    %243 = vmatpush1.msra.mxu0 0.0
    %244 = vmatprep.subr.mxu0 0.0
    %245 = vmatpush1.msra.mxu0 0.0
    %246 = vmatprep.subr.mxu0 0.0
    %247 = vmatpush1.msra.mxu0 0.0
    %248 = vmatprep.subr.mxu0 0.0
    %249 = vmatpush1.msra.mxu0 0.0
    %250 = vmatprep.subr.mxu0 0.0
    %251 = vmatpush1.msra.mxu0 0.0
    %252 = vmatprep.mubr.f32.mxu0 0.0
    %253 = vmatmul.mubr.f32.gmra.mrb[0].mxu0 %v183
    %v254 = vpop.f32.mrb[0].mxu0
    %v255 = vadd.f32 %v174, %v254
    %v256 = vpop.f32.mrb[0].mxu0
    %v257 = vadd.f32 %v174, %v256
    %258 = vmatprep.mubr.f32.mxu0 0.0
    %259 = vmatmul.mubr.f32.gmra.mrb[0].mxu0 %v186
    %v260 = vpop.f32.mrb[0].mxu0
    %v261 = vadd.f32 %v179, %v260
    %v262 = vpop.f32.mrb[0].mxu0
    %v263 = vadd.f32 %v179, %v262
    %264 = vdwg.mxu0
    %v265 = vand.u32 2147483647, %v261
    %v266 = vand.u32 2147483647, %v263
    %vm267 = vcmask 1042432
    %v268 = vsel %vm267, %v265, 0.0
    %v269 = vrot.slane %v268, 4
    %v270 = vadd.f32 %v268, %v269
    %v271 = vrot.slane %v270, 2
    %v272 = vadd.f32 %v270, %v271
    %v273 = vrot.slane %v272, 1
    %v274 = vadd.f32 %v272, %v273
    %v275 = vsel %vm267, %v266, 0.0
    %v276 = vrot.slane %v275, 4
    %v277 = vadd.f32 %v275, %v276
    %v278 = vrot.slane %v277, 2
    %v279 = vadd.f32 %v277, %v278
    %v280 = vrot.slane %v279, 1
    %v281 = vadd.f32 %v279, %v280
    %v282 = vrcp.pop %v274
    %v283 = vrcp.pop %v281
    %v284 = vmul.f32 %v265, %v282
    %v285 = vmul.f32 %v266, %v283
    %v286 = vld [vmem:[%s1] ss:$2 sm:$0x3]
    %s287 = scalar_lea.vmem %s1, 1
    %v288 = vld [vmem:[%s287] ss:$2 sm:$0x3]
    %v291 = vrot.slane %v284, 1
    %v292 = vrot.slane %v285, 1
    %v295 = vadd.f32 %v284, %v291
    %v296 = vadd.f32 %v285, %v292
    %v297 = vcombine.low %v284, %v285
    %v299 = vunpack.c.l.s4 1966171168
    %v300 = vunpack.c.0.s8 %v299
    %v301 = vlaneseq
    %v302 = vshrl.u32 %v301, 7
    %v303 = vsub.s32 %v300, %v302
    %v304 = vrot.slane %v297, %v303
    %v306 = vunpack.c.l.s4 1966171168
    %v307 = vunpack.c.0.s8 %v306
    %v308 = vlaneseq
    %v309 = vshrl.u32 %v308, 7
    %v310 = vsub.s32 %v307, %v309
    %v311 = vrot.slane %v304, %v310
    %vm313 = vcmp.lt.f32.partialorder %v286, %v311
    %vm314 = vmxor %vm313, 1
    %v317 = vcombine.low %v295, %v296
    %v319 = vunpack.c.l.s4 1966171168
    %v320 = vunpack.c.0.s8 %v319
    %v321 = vlaneseq
    %v322 = vshrl.u32 %v321, 7
    %v323 = vsub.s32 %v320, %v322
    %v324 = vrot.slane %v317, %v323
    %v326 = vunpack.c.l.s4 1966171168
    %v327 = vunpack.c.0.s8 %v326
    %v328 = vlaneseq
    %v329 = vshrl.u32 %v328, 7
    %v330 = vsub.s32 %v327, %v329
    %v331 = vrot.slane %v324, %v330
    %vm333 = vcmp.lt.f32.partialorder %v286, %v331
    %vm334 = vmand %vm314, %vm333
    %vm335 = vmor %vm313, %vm334
    %v336 = vsub.f32 %v286, %v311
    %v337 = vsub.f32 %v286, %v331
    %v338 = vsel %vm334, %v336, %v337
    %v339 = vsel %vm313, %v286, %v338
    %v340 = vcombine.high %v304, %v304
    %v342 = vunpack.c.l.s4 1966171168
    %v343 = vunpack.c.0.s8 %v342
    %v344 = vlaneseq
    %v345 = vshrl.u32 %v344, 7
    %v346 = vsub.s32 %v343, %v345
    %v347 = vrot.slane %v340, %v346
    %v349 = vcombine.high %v311, %v311
    %v351 = vsel %vm334, %v347, %v349
    %v352 = vsel %vm313, %v311, %v351
    %v353 = vrcp.pop %v352
    %v354 = vmul.f32 %v339, %v353
    %v355 = vmul.f32 %v255, 1.442695
    %v356 = vpow.pop %v355
    %v357 = vmul.f32 %v257, 1.442695
    %v358 = vpow.pop %v357
    %v359 = vrcp.pop %v356
    %v360 = vrcp.pop %v358
    %v361 = vmax.f32 %v354, 1e-12
    %v362 = vlog2.pop %v361
    %v363 = vmul.f32 %v362, 0.6931472
    %v364 = vmul.f32 %v363, -2.0
    %v365 = vrsqrt.pop %v364
    %v366 = vmul.f32 %v364, %v365
    %vm367 = vcmp.eq.f32.partialorder %v364, inf
    %v368 = vsel %vm367, %v364, %v366
    %vm369 = vcmp.eq.f32.partialorder %v364, 0.0
    %v370 = vand.u32 %v364, 2147483648
    %v371 = vsel %vm369, %v370, %v368
    %v372 = vmul.f32 %v288, 6.2831855
    %v373 = vand.u32 2147483647, %v372
    %vm374 = vcmp.le.f32.partialorder %v373, 0.7853982
    %vm375 = vcmp.lt.s32.totalorder %v372, 0
    %v376 = vand.u32 %v372, 2139095040
    %v377 = vshrl.u32 %v376, 23
    %v378 = vsub.s32 %v377, 127
    %v379 = vand.u32 2147483647, %v372
    %v380 = vand.u32 %v379, 8388607
    %v381 = vor.u32 %v380, 8388608
    %v382 = vsub.s32 0, %v381
    %v383 = vadd.s32 %v378, 1
    %vm384 = vcmp.gt.s32.totalorder %v383, 0
    %v385 = vsel %vm384, %v383, 0
    %v386 = vshrl.u32 %v385, 5
    %v387 = vand.u32 %v385, 31
    %v388 = vsub.s32 32, %v387
    %v389 = vshrl.u32 683565275, %v388
    %v390 = vshll.u32 683565275, %v387
    %v391 = vshrl.u32 2475754826, %v388
    %v392 = vor.u32 %v390, %v391
    %v393 = vshll.u32 2475754826, %v387
    %v394 = vshrl.u32 2131351028, %v388
    %v395 = vor.u32 %v393, %v394
    %v396 = vshll.u32 2131351028, %v387
    %v397 = vshrl.u32 2102212464, %v388
    %v398 = vor.u32 %v396, %v397
    %v399 = vshll.u32 2102212464, %v387
    %v400 = vshrl.u32 920167782, %v388
    %v401 = vor.u32 %v399, %v400
    %v402 = vshll.u32 920167782, %v387
    %v403 = vshrl.u32 1326507024, %v388
    %v404 = vor.u32 %v402, %v403
    %vm405 = vcmp.lt.s32.totalorder %v386, 1
    %vm406 = vcmp.lt.s32.totalorder %v386, 2
    %vm407 = vcmp.lt.s32.totalorder %v386, 3
    %vm408 = vcmp.lt.s32.totalorder %v386, 4
    %v409 = vsel %vm405, %v389, %v392
    %v410 = vsel %vm408, %v398, 2102212464
    %v411 = vsel %vm407, %v395, %v410
    %v412 = vsel %vm406, %v409, %v411
    %v413 = vsel %vm405, %v392, %v395
    %v414 = vsel %vm408, %v401, 920167782
    %v415 = vsel %vm407, %v398, %v414
    %v416 = vsel %vm406, %v413, %v415
    %v417 = vsel %vm405, %v395, %v398
    %v418 = vsel %vm408, %v404, 1326507024
    %v419 = vsel %vm407, %v401, %v418
    %v420 = vsel %vm406, %v417, %v419
    %v421 = vshll.u32 %v381, 8
    %v422 = vmul.u32.u64.compose %v421, %v420
    %v423 = vextract.low.u32 %v422
    %v424 = vextract.high.u32 %v422
    %v425 = vmul.u32.u64.compose %v421, %v416
    %v426 = vextract.low.u32 %v425
    %v427 = vextract.high.u32 %v425
    %v428 = vmul.u32 %v421, %v412
    %v429 = vadd.s32 %v424, %v426
    %vm430 = vc.u32 %v424, %v426
    %v431 = vadd.s32 %v427, 1
    %v432 = vsel %vm430, %v431, %v427
    %v433 = vadd.s32 %v428, %v432
    %v434 = vadd.s32 %v433, 536870912
    %v435 = vshrl.u32 %v434, 30
    %v436 = vshll.u32 %v435, 30
    %v437 = vsub.s32 %v433, %v436
    %vm438 = vcmp.lt.s32.totalorder %v437, 0
    %v439 = vsub.s32 0, %v437
    %v440 = vsel %vm438, %v439, %v437
    %v441 = vclz %v440
    %v442 = vsub.s32 %v441, 2
    %vm443 = vcmp.gt.s32.totalorder 0, %v442
    %v444 = vsel %vm443, 0, %v442
    %v445 = vsub.s32 32, %v444
    %v446 = vshll.u32 %v437, %v444
    %v447 = vshrl.u32 %v429, %v445
    %v448 = vor.u32 %v446, %v447
    %v449 = vsub.s32 4294967266, %v444
    %v450 = vadd.s32 %v449, 127
    %v451 = vshll.u32 %v450, 23
    %v452 = vor.u32 4788187, %v451
    %v453 = vand.u32 2147483647, %v452
    %v455 = vcvt.s32.f32 %v448
    %v456 = vmul.f32 %v455, %v453
    %v457 = vxor.u32 %v456, 2147483648
    %v458 = vsel %vm375, %v457, %v456
    %v459 = vsub.s32 4, %v435
    %v460 = vsel %vm375, %v459, %v435
    %v461 = vsel %vm374, %v372, %v458
    %v462 = vsel %vm374, 0, %v460
    %v463 = vcosq.f32.pop %v461
    %v464 = vsinq.f32.pop %v461
    %vm465 = vweird.f32 %v372
    %v466 = vand.u32 %v462, 3
    %vm467 = vcmp.lt.s32.totalorder %v466, 2
    %vm468 = vcmp.eq.s32.totalorder %v466, 0
    %v469 = vxor.u32 %v464, 2147483648
    %v470 = vsel %vm468, %v463, %v469
    %vm471 = vcmp.eq.s32.totalorder %v466, 2
    %v472 = vxor.u32 %v463, 2147483648
    %v473 = vsel %vm471, %v472, %v464
    %v474 = vsel %vm467, %v470, %v473
    %v475 = vsel %vm465, nan, %v474
    %v476 = vmul.f32 %v371, %v475
    %v477 = vand.u32 2147483647, %v372
    %vm478 = vcmp.le.f32.partialorder %v477, 0.7853982
    %vm479 = vcmp.lt.s32.totalorder %v372, 0
    %v480 = vand.u32 %v372, 2139095040
    %v481 = vshrl.u32 %v480, 23
    %v482 = vsub.s32 %v481, 127
    %v483 = vand.u32 2147483647, %v372
    %v484 = vand.u32 %v483, 8388607
    %v485 = vor.u32 %v484, 8388608
    %v486 = vsub.s32 0, %v485
    %v487 = vadd.s32 %v482, 1
    %vm488 = vcmp.gt.s32.totalorder %v487, 0
    %v489 = vsel %vm488, %v487, 0
    %v490 = vshrl.u32 %v489, 5
    %v491 = vand.u32 %v489, 31
    %v492 = vsub.s32 32, %v491
    %v493 = vshrl.u32 683565275, %v492
    %v494 = vshll.u32 683565275, %v491
    %v495 = vshrl.u32 2475754826, %v492
    %v496 = vor.u32 %v494, %v495
    %v497 = vshll.u32 2475754826, %v491
    %v498 = vshrl.u32 2131351028, %v492
    %v499 = vor.u32 %v497, %v498
    %v500 = vshll.u32 2131351028, %v491
    %v501 = vshrl.u32 2102212464, %v492
    %v502 = vor.u32 %v500, %v501
    %v503 = vshll.u32 2102212464, %v491
    %v504 = vshrl.u32 920167782, %v492
    %v505 = vor.u32 %v503, %v504
    %v506 = vshll.u32 920167782, %v491
    %v507 = vshrl.u32 1326507024, %v492
    %v508 = vor.u32 %v506, %v507
    %vm509 = vcmp.lt.s32.totalorder %v490, 1
    %vm510 = vcmp.lt.s32.totalorder %v490, 2
    %vm511 = vcmp.lt.s32.totalorder %v490, 3
    %vm512 = vcmp.lt.s32.totalorder %v490, 4
    %v513 = vsel %vm509, %v493, %v496
    %v514 = vsel %vm512, %v502, 2102212464
    %v515 = vsel %vm511, %v499, %v514
    %v516 = vsel %vm510, %v513, %v515
    %v517 = vsel %vm509, %v496, %v499
    %v518 = vsel %vm512, %v505, 920167782
    %v519 = vsel %vm511, %v502, %v518
    %v520 = vsel %vm510, %v517, %v519
    %v521 = vsel %vm509, %v499, %v502
    %v522 = vsel %vm512, %v508, 1326507024
    %v523 = vsel %vm511, %v505, %v522
    %v524 = vsel %vm510, %v521, %v523
    %v525 = vshll.u32 %v485, 8
    %v526 = vmul.u32.u64.compose %v525, %v524
    %v527 = vextract.low.u32 %v526
    %v528 = vextract.high.u32 %v526
    %v529 = vmul.u32.u64.compose %v525, %v520
    %v530 = vextract.low.u32 %v529
    %v531 = vextract.high.u32 %v529
    %v532 = vmul.u32 %v525, %v516
    %v533 = vadd.s32 %v528, %v530
    %vm534 = vc.u32 %v528, %v530
    %v535 = vadd.s32 %v531, 1
    %v536 = vsel %vm534, %v535, %v531
    %v537 = vadd.s32 %v532, %v536
    %v538 = vadd.s32 %v537, 536870912
    %v539 = vshrl.u32 %v538, 30
    %v540 = vshll.u32 %v539, 30
    %v541 = vsub.s32 %v537, %v540
    %vm542 = vcmp.lt.s32.totalorder %v541, 0
    %v543 = vsub.s32 0, %v541
    %v544 = vsel %vm542, %v543, %v541
    %v545 = vclz %v544
    %v546 = vsub.s32 %v545, 2
    %vm547 = vcmp.gt.s32.totalorder 0, %v546
    %v548 = vsel %vm547, 0, %v546
    %v549 = vsub.s32 32, %v548
    %v550 = vshll.u32 %v541, %v548
    %v551 = vshrl.u32 %v533, %v549
    %v552 = vor.u32 %v550, %v551
    %v553 = vsub.s32 4294967266, %v548
    %v554 = vadd.s32 %v553, 127
    %v555 = vshll.u32 %v554, 23
    %v556 = vor.u32 4788187, %v555
    %v557 = vand.u32 2147483647, %v556
    %v559 = vcvt.s32.f32 %v552
    %v560 = vmul.f32 %v559, %v557
    %v561 = vxor.u32 %v560, 2147483648
    %v562 = vsel %vm479, %v561, %v560
    %v563 = vsub.s32 4, %v539
    %v564 = vsel %vm479, %v563, %v539
    %v565 = vsel %vm478, %v372, %v562
    %v566 = vsel %vm478, 0, %v564
    %v567 = vcosq.f32.pop %v565
    %v568 = vsinq.f32.pop %v565
    %vm569 = vweird.f32 %v372
    %v570 = vadd.s32 %v566, 3
    %v571 = vand.u32 %v570, 3
    %vm572 = vcmp.lt.s32.totalorder %v571, 2
    %vm573 = vcmp.eq.s32.totalorder %v571, 0
    %v574 = vxor.u32 %v568, 2147483648
    %v575 = vsel %vm573, %v567, %v574
    %vm576 = vcmp.eq.s32.totalorder %v571, 2
    %v577 = vxor.u32 %v567, 2147483648
    %v578 = vsel %vm576, %v577, %v568
    %v579 = vsel %vm572, %v575, %v578
    %v580 = vsel %vm569, nan, %v579
    %v581 = vmul.f32 %v371, %v580
    %v584 = vcombine.low %v255, %v257
    %v586 = vunpack.c.l.s4 1966171168
    %v587 = vunpack.c.0.s8 %v586
    %v588 = vlaneseq
    %v589 = vshrl.u32 %v588, 7
    %v590 = vsub.s32 %v587, %v589
    %v591 = vrot.slane %v584, %v590
    %v593 = vunpack.c.l.s4 1966171168
    %v594 = vunpack.c.0.s8 %v593
    %v595 = vlaneseq
    %v596 = vshrl.u32 %v595, 7
    %v597 = vsub.s32 %v594, %v596
    %v598 = vrot.slane %v591, %v597
    %v600 = vcombine.high %v598, %v598
    %v602 = vsel %vm313, %v598, %v600
    %v603 = vcombine.high %v591, %v591
    %v605 = vunpack.c.l.s4 1966171168
    %v606 = vunpack.c.0.s8 %v605
    %v607 = vlaneseq
    %v608 = vshrl.u32 %v607, 7
    %v609 = vsub.s32 %v606, %v608
    %v610 = vrot.slane %v603, %v609
    %v612 = vcombine.high %v610, %v610
    %v614 = vsel %vm313, %v610, %v612
    %v617 = vcombine.high %v356, %v358
    %v619 = vunpack.c.l.s4 1966171168
    %v620 = vunpack.c.0.s8 %v619
    %v621 = vlaneseq
    %v622 = vshrl.u32 %v621, 7
    %v623 = vsub.s32 %v620, %v622
    %v624 = vrot.slane %v617, %v623
    %v626 = vunpack.c.l.s4 1966171168
    %v627 = vunpack.c.0.s8 %v626
    %v628 = vlaneseq
    %v629 = vshrl.u32 %v628, 7
    %v630 = vsub.s32 %v627, %v629
    %v631 = vrot.slane %v624, %v630
    %v633 = vcombine.high %v631, %v631
    %v635 = vsel %vm313, %v631, %v633
    %v636 = vcombine.high %v624, %v624
    %v638 = vunpack.c.l.s4 1966171168
    %v639 = vunpack.c.0.s8 %v638
    %v640 = vlaneseq
    %v641 = vshrl.u32 %v640, 7
    %v642 = vsub.s32 %v639, %v641
    %v643 = vrot.slane %v636, %v642
    %v645 = vcombine.high %v643, %v643
    %v647 = vsel %vm313, %v643, %v645
    %v648 = vmul.f32 %v476, %v635
    %v649 = vadd.f32 %v648, %v602
    %v650 = vmul.f32 %v581, %v647
    %v651 = vadd.f32 %v650, %v614
    %v652 = vmul.f32 %v354, 2.0
    %v653 = vsub.f32 %v652, 1.0
    %v654 = vmul.f32 %v288, 2.0
    %v655 = vsub.f32 %v654, 1.0
    %vm656 = vcmp.eq.f32.partialorder %v653, 0.0
    %vm657 = vcmp.eq.f32.partialorder %v655, 0.0
    %vm658 = vmand %vm656, %vm657
    %v659 = vand.u32 2147483647, %v653
    %v660 = vand.u32 2147483647, %v655
    %vm661 = vcmp.gt.f32.partialorder %v659, %v660
    %vm662 = vmxor %vm658, 1
    %vm663 = vmand %vm661, %vm662
    %v664 = vmul.f32 %v655, 0.7853982
    %v665 = vrcp.pop %v653
    %v666 = vmul.f32 %v664, %v665
    %v667 = vmul.f32 %v653, 0.7853982
    %v668 = vrcp.pop %v655
    %v669 = vmul.f32 %v667, %v668
    %v670 = vsub.f32 1.5707964, %v669
    %v671 = vsel %vm663, %v666, %v670
    %v672 = vsel %vm663, %v653, %v655
    %v673 = vand.u32 2147483647, %v671
    %vm674 = vcmp.le.f32.partialorder %v673, 0.7853982
    %vm675 = vcmp.lt.s32.totalorder %v671, 0
    %v676 = vand.u32 %v671, 2139095040
    %v677 = vshrl.u32 %v676, 23
    %v678 = vsub.s32 %v677, 127
    %v679 = vand.u32 2147483647, %v671
    %v680 = vand.u32 %v679, 8388607
    %v681 = vor.u32 %v680, 8388608
    %v682 = vsub.s32 0, %v681
    %v683 = vadd.s32 %v678, 1
    %vm684 = vcmp.gt.s32.totalorder %v683, 0
    %v685 = vsel %vm684, %v683, 0
    %v686 = vshrl.u32 %v685, 5
    %v687 = vand.u32 %v685, 31
    %v688 = vsub.s32 32, %v687
    %v689 = vshrl.u32 683565275, %v688
    %v690 = vshll.u32 683565275, %v687
    %v691 = vshrl.u32 2475754826, %v688
    %v692 = vor.u32 %v690, %v691
    %v693 = vshll.u32 2475754826, %v687
    %v694 = vshrl.u32 2131351028, %v688
    %v695 = vor.u32 %v693, %v694
    %v696 = vshll.u32 2131351028, %v687
    %v697 = vshrl.u32 2102212464, %v688
    %v698 = vor.u32 %v696, %v697
    %v699 = vshll.u32 2102212464, %v687
    %v700 = vshrl.u32 920167782, %v688
    %v701 = vor.u32 %v699, %v700
    %v702 = vshll.u32 920167782, %v687
    %v703 = vshrl.u32 1326507024, %v688
    %v704 = vor.u32 %v702, %v703
    %vm705 = vcmp.lt.s32.totalorder %v686, 1
    %vm706 = vcmp.lt.s32.totalorder %v686, 2
    %vm707 = vcmp.lt.s32.totalorder %v686, 3
    %vm708 = vcmp.lt.s32.totalorder %v686, 4
    %v709 = vsel %vm705, %v689, %v692
    %v710 = vsel %vm708, %v698, 2102212464
    %v711 = vsel %vm707, %v695, %v710
    %v712 = vsel %vm706, %v709, %v711
    %v713 = vsel %vm705, %v692, %v695
    %v714 = vsel %vm708, %v701, 920167782
    %v715 = vsel %vm707, %v698, %v714
    %v716 = vsel %vm706, %v713, %v715
    %v717 = vsel %vm705, %v695, %v698
    %v718 = vsel %vm708, %v704, 1326507024
    %v719 = vsel %vm707, %v701, %v718
    %v720 = vsel %vm706, %v717, %v719
    %v721 = vshll.u32 %v681, 8
    %v722 = vmul.u32.u64.compose %v721, %v720
    %v723 = vextract.low.u32 %v722
    %v724 = vextract.high.u32 %v722
    %v725 = vmul.u32.u64.compose %v721, %v716
    %v726 = vextract.low.u32 %v725
    %v727 = vextract.high.u32 %v725
    %v728 = vmul.u32 %v721, %v712
    %v729 = vadd.s32 %v724, %v726
    %vm730 = vc.u32 %v724, %v726
    %v731 = vadd.s32 %v727, 1
    %v732 = vsel %vm730, %v731, %v727
    %v733 = vadd.s32 %v728, %v732
    %v734 = vadd.s32 %v733, 536870912
    %v735 = vshrl.u32 %v734, 30
    %v736 = vshll.u32 %v735, 30
    %v737 = vsub.s32 %v733, %v736
    %vm738 = vcmp.lt.s32.totalorder %v737, 0
    %v739 = vsub.s32 0, %v737
    %v740 = vsel %vm738, %v739, %v737
    %v741 = vclz %v740
    %v742 = vsub.s32 %v741, 2
    %vm743 = vcmp.gt.s32.totalorder 0, %v742
    %v744 = vsel %vm743, 0, %v742
    %v745 = vsub.s32 32, %v744
    %v746 = vshll.u32 %v737, %v744
    %v747 = vshrl.u32 %v729, %v745
    %v748 = vor.u32 %v746, %v747
    %v749 = vsub.s32 4294967266, %v744
    %v750 = vadd.s32 %v749, 127
    %v751 = vshll.u32 %v750, 23
    %v752 = vor.u32 4788187, %v751
    %v753 = vand.u32 2147483647, %v752
    %v755 = vcvt.s32.f32 %v748
    %v756 = vmul.f32 %v755, %v753
    %v757 = vxor.u32 %v756, 2147483648
    %v758 = vsel %vm675, %v757, %v756
    %v759 = vsub.s32 4, %v735
    %v760 = vsel %vm675, %v759, %v735
    %v761 = vsel %vm674, %v671, %v758
    %v762 = vsel %vm674, 0, %v760
    %v763 = vcosq.f32.pop %v761
    %v764 = vsinq.f32.pop %v761
    %vm765 = vweird.f32 %v671
    %v766 = vand.u32 %v762, 3
    %vm767 = vcmp.lt.s32.totalorder %v766, 2
    %vm768 = vcmp.eq.s32.totalorder %v766, 0
    %v769 = vxor.u32 %v764, 2147483648
    %v770 = vsel %vm768, %v763, %v769
    %vm771 = vcmp.eq.s32.totalorder %v766, 2
    %v772 = vxor.u32 %v763, 2147483648
    %v773 = vsel %vm771, %v772, %v764
    %v774 = vsel %vm767, %v770, %v773
    %v775 = vsel %vm765, nan, %v774
    %v776 = vmul.f32 %v672, %v775
    %v777 = vsel %vm658, 0.0, %v776
    %v778 = vand.u32 2147483647, %v671
    %vm779 = vcmp.le.f32.partialorder %v778, 0.7853982
    %vm780 = vcmp.lt.s32.totalorder %v671, 0
    %v781 = vand.u32 %v671, 2139095040
    %v782 = vshrl.u32 %v781, 23
    %v783 = vsub.s32 %v782, 127
    %v784 = vand.u32 2147483647, %v671
    %v785 = vand.u32 %v784, 8388607
    %v786 = vor.u32 %v785, 8388608
    %v787 = vsub.s32 0, %v786
    %v788 = vadd.s32 %v783, 1
    %vm789 = vcmp.gt.s32.totalorder %v788, 0
    %v790 = vsel %vm789, %v788, 0
    %v791 = vshrl.u32 %v790, 5
    %v792 = vand.u32 %v790, 31
    %v793 = vsub.s32 32, %v792
    %v794 = vshrl.u32 683565275, %v793
    %v795 = vshll.u32 683565275, %v792
    %v796 = vshrl.u32 2475754826, %v793
    %v797 = vor.u32 %v795, %v796
    %v798 = vshll.u32 2475754826, %v792
    %v799 = vshrl.u32 2131351028, %v793
    %v800 = vor.u32 %v798, %v799
    %v801 = vshll.u32 2131351028, %v792
    %v802 = vshrl.u32 2102212464, %v793
    %v803 = vor.u32 %v801, %v802
    %v804 = vshll.u32 2102212464, %v792
    %v805 = vshrl.u32 920167782, %v793
    %v806 = vor.u32 %v804, %v805
    %v807 = vshll.u32 920167782, %v792
    %v808 = vshrl.u32 1326507024, %v793
    %v809 = vor.u32 %v807, %v808
    %vm810 = vcmp.lt.s32.totalorder %v791, 1
    %vm811 = vcmp.lt.s32.totalorder %v791, 2
    %vm812 = vcmp.lt.s32.totalorder %v791, 3
    %vm813 = vcmp.lt.s32.totalorder %v791, 4
    %v814 = vsel %vm810, %v794, %v797
    %v815 = vsel %vm813, %v803, 2102212464
    %v816 = vsel %vm812, %v800, %v815
    %v817 = vsel %vm811, %v814, %v816
    %v818 = vsel %vm810, %v797, %v800
    %v819 = vsel %vm813, %v806, 920167782
    %v820 = vsel %vm812, %v803, %v819
    %v821 = vsel %vm811, %v818, %v820
    %v822 = vsel %vm810, %v800, %v803
    %v823 = vsel %vm813, %v809, 1326507024
    %v824 = vsel %vm812, %v806, %v823
    %v825 = vsel %vm811, %v822, %v824
    %v826 = vshll.u32 %v786, 8
    %v827 = vmul.u32.u64.compose %v826, %v825
    %v828 = vextract.low.u32 %v827
    %v829 = vextract.high.u32 %v827
    %v830 = vmul.u32.u64.compose %v826, %v821
    %v831 = vextract.low.u32 %v830
    %v832 = vextract.high.u32 %v830
    %v833 = vmul.u32 %v826, %v817
    %v834 = vadd.s32 %v829, %v831
    %vm835 = vc.u32 %v829, %v831
    %v836 = vadd.s32 %v832, 1
    %v837 = vsel %vm835, %v836, %v832
    %v838 = vadd.s32 %v833, %v837
    %v839 = vadd.s32 %v838, 536870912
    %v840 = vshrl.u32 %v839, 30
    %v841 = vshll.u32 %v840, 30
    %v842 = vsub.s32 %v838, %v841
    %vm843 = vcmp.lt.s32.totalorder %v842, 0
    %v844 = vsub.s32 0, %v842
    %v845 = vsel %vm843, %v844, %v842
    %v846 = vclz %v845
    %v847 = vsub.s32 %v846, 2
    %vm848 = vcmp.gt.s32.totalorder 0, %v847
    %v849 = vsel %vm848, 0, %v847
    %v850 = vsub.s32 32, %v849
    %v851 = vshll.u32 %v842, %v849
    %v852 = vshrl.u32 %v834, %v850
    %v853 = vor.u32 %v851, %v852
    %v854 = vsub.s32 4294967266, %v849
    %v855 = vadd.s32 %v854, 127
    %v856 = vshll.u32 %v855, 23
    %v857 = vor.u32 4788187, %v856
    %v858 = vand.u32 2147483647, %v857
    %v860 = vcvt.s32.f32 %v853
    %v861 = vmul.f32 %v860, %v858
    %v862 = vxor.u32 %v861, 2147483648
    %v863 = vsel %vm780, %v862, %v861
    %v864 = vsub.s32 4, %v840
    %v865 = vsel %vm780, %v864, %v840
    %v866 = vsel %vm779, %v671, %v863
    %v867 = vsel %vm779, 0, %v865
    %v868 = vcosq.f32.pop %v866
    %v869 = vsinq.f32.pop %v866
    %vm870 = vweird.f32 %v671
    %v871 = vadd.s32 %v867, 3
    %v872 = vand.u32 %v871, 3
    %vm873 = vcmp.lt.s32.totalorder %v872, 2
    %vm874 = vcmp.eq.s32.totalorder %v872, 0
    %v875 = vxor.u32 %v869, 2147483648
    %v876 = vsel %vm874, %v868, %v875
    %vm877 = vcmp.eq.s32.totalorder %v872, 2
    %v878 = vxor.u32 %v868, 2147483648
    %v879 = vsel %vm877, %v878, %v869
    %v880 = vsel %vm873, %v876, %v879
    %v881 = vsel %vm870, nan, %v880
    %v882 = vmul.f32 %v672, %v881
    %v883 = vsel %vm658, 0.0, %v882
    %v884 = vsel %vm335, %v649, %v777
    %v885 = vsel %vm335, %v651, %v883
    %v887 = vlaneseq
    %v888 = vshrl.u32 %v887, 7
    %v889 = vsub.s32 0, %v888
    %v890 = vrot.slane %v884, %v889
    %v891 = vlaneseq
    %v892 = vshrl.u32 %v891, 7
    %v893 = vsub.s32 1, %v892
    %v894 = vrot.slane %v884, %v893
    %v898 = vlaneseq
    %v899 = vshrl.u32 %v898, 7
    %v900 = vsub.s32 0, %v899
    %v901 = vrot.slane %v885, %v900
    %v902 = vlaneseq
    %v903 = vshrl.u32 %v902, 7
    %v904 = vsub.s32 1, %v903
    %v905 = vrot.slane %v885, %v904
    %vm908 = vcmask 1040384
    %v909 = vsel %vm908, %v890, %v901
    %v910 = vsel %vm908, %v894, %v905
    %v913 = vrot.slane %v909, 6
    %v914 = vrot.slane %v910, 6
    %vm917 = vcmask 1041408
    %v918 = vsel %vm917, %v909, %v913
    %v919 = vsel %vm917, %v910, %v914
    %v920 = vsub.f32 %v918, %v255
    %v921 = vsub.f32 %v919, %v257
    %v924 = vrot.slane %v359, 4
    %v925 = vrot.slane %v360, 4
    %v928 = vmul.f32 %v920, %v924
    %v929 = vmul.f32 %v921, %v925
    %v930 = vmul.f32 %v928, %v928
    %v931 = vmul.f32 %v929, %v929
    %v934 = vrot.slane %v930, 1
    %v935 = vrot.slane %v931, 1
    %v938 = vadd.f32 %v930, %v934
    %v939 = vadd.f32 %v931, %v935
    %v940 = vrot.slane %v255, 1
    %v941 = vrot.slane %v257, 1
    %v944 = vadd.f32 %v255, %v940
    %v945 = vadd.f32 %v257, %v941
    %v946 = vadd.f32 %v284, 1e-05
    %v947 = vadd.f32 %v285, 1e-05
    %v948 = vlog2.pop %v946
    %v949 = vmul.f32 %v948, 0.6931472
    %v950 = vlog2.pop %v947
    %v951 = vmul.f32 %v950, 0.6931472
    %v952 = vadd.f32 %v949, -1.837877
    %v953 = vadd.f32 %v951, -1.837877
    %v954 = vmul.f32 %v938, 0.5
    %v955 = vmul.f32 %v939, 0.5
    %v956 = vsub.f32 %v952, %v954
    %v957 = vsub.f32 %v953, %v955
    %v960 = vrot.slane %v944, 4
    %v961 = vrot.slane %v945, 4
    %v964 = vsub.f32 %v956, %v960
    %v965 = vsub.f32 %v957, %v961
    %v968 = vrot.slane %v954, 1
    %v969 = vrot.slane %v955, 1
    %v972 = vsub.f32 %v952, %v968
    %v973 = vsub.f32 %v953, %v969
    %v974 = vrot.slane %v944, 5
    %v975 = vrot.slane %v945, 5
    %v978 = vsub.f32 %v972, %v974
    %v979 = vsub.f32 %v973, %v975
    %v980 = vmul.f32 %v884, %v884
    %v981 = vmul.f32 %v885, %v885
    %v982 = vadd.f32 %v980, %v981
    %vm983 = vcmp.gt.f32.partialorder %v982, 1.0
    %v984 = vsel %vm983, -11.512925, -1.1446985
    %v985 = vlog2.pop %v284
    %v986 = vmul.f32 %v985, 0.6931472
    %v987 = vlog2.pop %v285
    %v988 = vmul.f32 %v987, 0.6931472
    %v991 = vcombine.low %v986, %v988
    %v993 = vunpack.c.l.s4 1966171168
    %v994 = vunpack.c.0.s8 %v993
    %v995 = vlaneseq
    %v996 = vshrl.u32 %v995, 7
    %v997 = vsub.s32 %v994, %v996
    %v998 = vrot.slane %v991, %v997
    %v1000 = vunpack.c.l.s4 1966171168
    %v1001 = vunpack.c.0.s8 %v1000
    %v1002 = vlaneseq
    %v1003 = vshrl.u32 %v1002, 7
    %v1004 = vsub.s32 %v1001, %v1003
    %v1005 = vrot.slane %v998, %v1004
    %v1006 = vcombine.high %v1005, %v1005
    %v1008 = vadd.f32 %v984, %v1006
    %v1010 = vlaneseq
    %v1011 = vshrl.u32 %v1010, 7
    %v1012 = vsub.s32 0, %v1011
    %v1013 = vrot.slane %v1008, %v1012
    %v1014 = vlaneseq
    %v1015 = vshrl.u32 %v1014, 7
    %v1016 = vsub.s32 1, %v1015
    %v1017 = vrot.slane %v1008, %v1016
    %v1020 = vsel %vm908, %v964, %v978
    %v1021 = vsel %vm908, %v965, %v979
    %v1022 = vsel %vm917, %v1020, %v1013
    %v1023 = vsel %vm917, %v1021, %v1017
    %v1024 = vsel %vm267, %v1022, -inf
    %v1025 = vrot.slane %v1024, 4
    %v1026 = vmax.f32 %v1024, %v1025
    %v1027 = vrot.slane %v1026, 2
    %v1028 = vmax.f32 %v1026, %v1027
    %v1029 = vrot.slane %v1028, 1
    %v1030 = vmax.f32 %v1028, %v1029
    %v1031 = vsel %vm267, %v1023, -inf
    %v1032 = vrot.slane %v1031, 4
    %v1033 = vmax.f32 %v1031, %v1032
    %v1034 = vrot.slane %v1033, 2
    %v1035 = vmax.f32 %v1033, %v1034
    %v1036 = vrot.slane %v1035, 1
    %v1037 = vmax.f32 %v1035, %v1036
    %v1038 = vsub.f32 %v1022, %v1030
    %v1039 = vsub.f32 %v1023, %v1037
    %v1040 = vmul.f32 %v1038, 1.442695
    %v1041 = vpow.pop %v1040
    %v1042 = vmul.f32 %v1039, 1.442695
    %v1043 = vpow.pop %v1042
    %v1044 = vsel %vm267, %v1041, 0.0
    %v1045 = vrot.slane %v1044, 4
    %v1046 = vadd.f32 %v1044, %v1045
    %v1047 = vrot.slane %v1046, 2
    %v1048 = vadd.f32 %v1046, %v1047
    %v1049 = vrot.slane %v1048, 1
    %v1050 = vadd.f32 %v1048, %v1049
    %v1051 = vsel %vm267, %v1043, 0.0
    %v1052 = vrot.slane %v1051, 4
    %v1053 = vadd.f32 %v1051, %v1052
    %v1054 = vrot.slane %v1053, 2
    %v1055 = vadd.f32 %v1053, %v1054
    %v1056 = vrot.slane %v1055, 1
    %v1057 = vadd.f32 %v1055, %v1056
    %v1058 = vlog2.pop %v1050
    %v1059 = vmul.f32 %v1058, 0.6931472
    %v1060 = vlog2.pop %v1057
    %v1061 = vmul.f32 %v1060, 0.6931472
    %v1062 = vadd.f32 %v1030, %v1059
    %v1063 = vadd.f32 %v1037, %v1061
    %v1064 = vlaneseq
    %vm1065 = vcmp.ge.s32.totalorder %v1064, 0
    %vm1066 = vcmp.lt.s32.totalorder %v1064, 256
    %vm1067 = vmand %vm1065, %vm1066
    %1068 = vst.msk [vmem:[#allocation2] ss:$2 sm:$0x3] %vm1067, %v884
    %s1069 = scalar_lea.vmem [#allocation2], 1
    %1070 = vst.msk [vmem:[%s1069] ss:$2 sm:$0x3] %vm1067, %v885
    %v1073 = vcombine.low %v1062, %v1063
    %v1075 = vunpack.c.l.s4 1966171168
    %v1076 = vunpack.c.0.s8 %v1075
    %v1077 = vlaneseq
    %v1078 = vshrl.u32 %v1077, 7
    %v1079 = vsub.s32 %v1076, %v1078
    %v1080 = vrot.slane %v1073, %v1079
    %v1082 = vunpack.c.l.s4 1966171168
    %v1083 = vunpack.c.0.s8 %v1082
    %v1084 = vlaneseq
    %v1085 = vshrl.u32 %v1084, 7
    %v1086 = vsub.s32 %v1083, %v1085
    %v1087 = vrot.slane %v1080, %v1086
    %1089 = vst.msk [vmem:[#allocation4] sm:$0x3] %vm1067, %v1087
    // Predicated region
    $region26: #{tpu_custom_call.1} parent=1 // pred_check
      _
    $region27: #{tpu_custom_call.1} parent=1 // pred_check_branch
      %1091 = sbr.rel (0) target = $region29
    $region28: #{tpu_custom_call.1} parent=1 // pred_region
      %s1093 = ssub.s32 64, 64
      %1094 = vsyncadd [#allocation3], %s1093
      %s1096 = sshll.u32 [#allocation2], 4
      %s1097 = int_to_ptr.vmem [resolvable:$true] %s1096
      %1099 = dma.vmem_to_hbm [thread:$0]  %s1097, 64, %s6, [#allocation3]
    $region29: #{tpu_custom_call.1} parent=1 // pred_fallthru
      _
    // Predicated region
    $region30: #{tpu_custom_call.1} parent=1 // pred_check
      _
    $region31: #{tpu_custom_call.1} parent=1 // pred_check_branch
      %1101 = sbr.rel (0) target = $region33
    $region32: #{tpu_custom_call.1} parent=1 // pred_region
      %s1103 = ssub.s32 32, 32
      %1104 = vsyncadd [#allocation5], %s1103
      %s1106 = sshll.u32 [#allocation4], 4
      %s1107 = int_to_ptr.vmem [resolvable:$true] %s1106
      %1109 = dma.vmem_to_hbm [thread:$0]  %s1107, 32, %s7, [#allocation5]
    $region33: #{tpu_custom_call.1} parent=1 // pred_fallthru
      _
    // Predicated region
    $region34: #{tpu_custom_call.1} parent=1 // pred_check
      _
    $region35: #{tpu_custom_call.1} parent=1 // pred_check_branch
      %1111 = sbr.rel (0) target = $region37
    $region36: #{tpu_custom_call.1} parent=1 // pred_region
      %1112 = dma.done [#allocation3], 64
    $region37: #{tpu_custom_call.1} parent=1 // pred_fallthru
      _
    // Predicated region
    $region38: #{tpu_custom_call.1} parent=1 // pred_check
      _
    $region39: #{tpu_custom_call.1} parent=1 // pred_check_branch
      %1114 = sbr.rel (0) target = $region41
    $region40: #{tpu_custom_call.1} parent=1 // pred_region
      %1115 = dma.done [#allocation5], 32
    $region41: #{tpu_custom_call.1} parent=1 // pred_fallthru
      _
    %1116 = vsyncpa [#allocation3], 1
    %1117 = vsyncpa [#allocation5], 1

</llo_original>
